<compile_context>
chip_gen: v6e
topology: v6e:2x2x1
jax: 0.10.0
libtpu: 0.0.40
codegen_flags: <defaults>
</compile_context>

<pallas_src>
import math

import jax
import jax.numpy as jnp
from jax.experimental import pallas as pl
from jax.experimental.pallas import tpu as pltpu


_LANE = 128
_TOTAL_VMEM_BUDGET = 40 << 20   # target bytes for double-buffered tiles
_VMEM_LIMIT = 48 << 20          # scoped-VMEM limit (headroom under v7x 64 MiB)
_MAX_W_VMEM = 4 << 20           # cap on the resident weight's VMEM footprint


def _round_up(x, m):
    return ((x + m - 1) // m) * m


def _coord_regress_kernel(p_ref, w_ref, o_ref):
    # p_ref: (TM, Lp) packed heatmap rows.
    # w_ref: (Lp, G) block-diagonal coordinate weights, resident in VMEM.
    # o_ref: (TM, G) expected coordinates (f32 accumulation on the MXU).
    o_ref[...] = jnp.dot(p_ref[...], w_ref[...],
                         preferred_element_type=jnp.float32)


def _choose_packing(n_rows, length, w_itemsize):
    """Pick G rows to fold into the lane axis so Lp = G*length is 128-aligned."""
    g_req = _LANE // math.gcd(length, _LANE)      # power of two
    g = math.gcd(n_rows, g_req)                   # must divide n_rows (free reshape)
    # Keep the resident weight (Lp x G, lane-padded to 128) small.
    while g > 1 and _round_up(g * length, 8) * _LANE * w_itemsize > _MAX_W_VMEM:
        g //= 2                                   # power of two -> still divides n_rows
    return g


def _choose_row_tile(n_rows_packed, lp, in_itemsize, w_vmem_bytes):
    """Largest row tile whose double-buffered VMEM footprint fits the budget."""
    sublane = max(8, 32 // in_itemsize)           # 8 f32 / 16 bf16 / 32 int8-fp8
    in_row = _round_up(lp, _LANE) * in_itemsize   # VMEM bytes per input row
    out_row = _LANE * 4                           # (TM, G) f32 pads G -> 128 lanes
    avail = max(_TOTAL_VMEM_BUDGET - 2 * w_vmem_bytes,
                2 * sublane * (in_row + out_row))
    tm = avail // (2 * (in_row + out_row))        # x2: double-buffered in + out
    tm = max(sublane, (tm // sublane) * sublane)
    if tm >= n_rows_packed:
        return n_rows_packed                      # single block == full dim (legal)
    return tm                                     # multiple of the sublane packing


def coord_regress(p: jax.Array, length: int) -> jax.Array:
    """CoordRegress forward. p: (B, C, L) -> (B, C) float32."""
    B, C, L = p.shape
    assert L == length
    N = B * C

    if p.dtype not in (jnp.float32, jnp.bfloat16):
        p = p.astype(jnp.float32)
    in_itemsize = jnp.dtype(p.dtype).itemsize
    w_dtype = p.dtype            # bf16 weights feed the MXU natively; f32 is exact
    w_itemsize = jnp.dtype(w_dtype).itemsize

    G = _choose_packing(N, L, w_itemsize)
    Lp = G * L
    NR = N // G

    # Block-diagonal coordinate weights: W[g*L + l, g] = l * (1/L).
    lvec = jnp.arange(L, dtype=jnp.float32) * (1.0 / L)
    W = (jnp.eye(G, dtype=jnp.float32)[:, None, :] * lvec[None, :, None])
    W = W.reshape(Lp, G).astype(w_dtype)
    w_vmem = _round_up(Lp, 8) * _LANE * w_itemsize

    TM = _choose_row_tile(NR, Lp, in_itemsize, w_vmem)
    n_tiles = pl.cdiv(NR, TM)

    p_packed = p.reshape(NR, Lp)   # free reshape: (B, C, L) is contiguous

    out = pl.pallas_call(
        _coord_regress_kernel,
        out_shape=jax.ShapeDtypeStruct((NR, G), jnp.float32),
        grid=(n_tiles,),
        in_specs=[
            pl.BlockSpec((TM, Lp), lambda i: (i, 0)),
            pl.BlockSpec((Lp, G), lambda i: (0, 0)),   # resident weight, fetched once
        ],
        out_specs=pl.BlockSpec((TM, G), lambda i: (i, 0)),
        compiler_params=pltpu.CompilerParams(
            # TODO(synk): if an xprof trace shows one v7x TC idle, switch this
            # axis to pltpu.CORE_PARALLEL (string "parallel" is portable/safe).
            dimension_semantics=("parallel",),
            vmem_limit_bytes=_VMEM_LIMIT,
        ),
        cost_estimate=pl.CostEstimate(
            flops=2 * NR * Lp * G,
            transcendentals=0,
            bytes_accessed=NR * Lp * in_itemsize + NR * G * 4 + Lp * G * w_itemsize,
        ),
    )(p_packed, W)

    return out.reshape(B, C)


if __name__ == "__main__":
    key = jax.random.PRNGKey(0)
    B, C, L = 2, 4, 16
    # Heatmap-like input (softmax over the length axis -> prob. distribution)
    logits = jax.random.normal(key, (B, C, L), dtype=jnp.float32)
    p = jax.nn.softmax(logits, axis=-1)

    out = jax.block_until_ready(coord_regress(p, L))

    # Reference: plain-JAX semantics of the PyTorch module
    xrange = jnp.arange(L, dtype=jnp.float32) / L
    ref = jnp.sum(p * xrange, axis=-1)
    assert out.shape == (B, C)
    assert jnp.allclose(out, ref, atol=1e-5, rtol=1e-5), (out, ref)

    print("KERNEL_OK")
</pallas_src>

<mosaic_0001>
module attributes {stable_mosaic.version = 11 : i64} {
  func.func @_coord_regress_kernel(%arg0: i32, %arg1: memref<1x128xf32, #tpu.memory_space<vmem>>, %arg2: memref<128x8xf32, #tpu.memory_space<vmem>>, %arg3: memref<1x8xf32, #tpu.memory_space<vmem>>) attributes {dimension_semantics = [#tpu.dimension_semantics<parallel>], iteration_bounds = array<i64: 1>, scalar_prefetch = 0 : i64, scratch_operands = 0 : i64, tpu.core_type = #tpu.core_type<tc>, window_params = [{transform_indices = @transform_0, window_bounds = array<i64: 1, 128>}, {pipeline_mode = #tpu.pipeline_mode<synchronous>, transform_indices = @transform_1, window_bounds = array<i64: 128, 8>}, {transform_indices = @transform_2, window_bounds = array<i64: 1, 8>}]} {
    %c0 = arith.constant 0 : index
    %c0_0 = arith.constant 0 : index
    %0 = vector.load %arg1[%c0, %c0_0] : memref<1x128xf32, #tpu.memory_space<vmem>>, vector<1x128xf32>
    %c0_1 = arith.constant 0 : index
    %c0_2 = arith.constant 0 : index
    %1 = vector.load %arg2[%c0_1, %c0_2] : memref<128x8xf32, #tpu.memory_space<vmem>>, vector<128x8xf32>
    %cst = arith.constant dense<0.000000e+00> : vector<1x8xf32>
    %2 = tpu.matmul %0, %1, %cst {dimension_numbers = #tpu.dot_dimension_numbers<[1], [0], [0], [1], [0, 0, 1, 1], [], []>} : vector<1x128xf32>, vector<128x8xf32>, vector<1x8xf32> -> vector<1x8xf32>
    %c0_3 = arith.constant 0 : index
    %c0_4 = arith.constant 0 : index
    %3 = vector.load %arg3[%c0_3, %c0_4] : memref<1x8xf32, #tpu.memory_space<vmem>>, vector<1x8xf32>
    tpu.vector_store %arg3[%c0_3, %c0_4], %2 {strides = array<i32>} : memref<1x8xf32, #tpu.memory_space<vmem>>, vector<1x8xf32>,
    return
  }
  func.func @transform_0(%arg0: i32) -> (i32, i32) {
    %c0_i32 = arith.constant 0 : i32
    %c0_i32_0 = arith.constant 0 : i32
    return %arg0, %c0_i32 : i32, i32
  }
  func.func @transform_1(%arg0: i32) -> (i32, i32) {
    %c0_i32 = arith.constant 0 : i32
    %c0_i32_0 = arith.constant 0 : i32
    %c0_i32_1 = arith.constant 0 : i32
    return %c0_i32, %c0_i32_0 : i32, i32
  }
  func.func @transform_2(%arg0: i32) -> (i32, i32) {
    %c0_i32 = arith.constant 0 : i32
    %c0_i32_0 = arith.constant 0 : i32
    return %arg0, %c0_i32 : i32, i32
  }
}

</mosaic_0001>

<llo_original>
// kernel: tpu_custom_call.1
$region0: #{tpu_custom_call.1}
  #allocation0 [shape = 'u32[]', space=smem, size = 0x4, offset = 0x4, fixed_abs, tag = 'smem constant byte address 0x4 - core index']
  #allocation1 [shape = 'u32[144,128]{1,0:T(1,128)}', space=vmem, size = 0x12000, scoped, tag = 'internal scratch']
  %s0 = inlined_call_operand.vmem [shape: f32[1,128], index: 0, kind: input, shape index: {}]
  %s1 = inlined_call_operand.vmem [shape: f32[128,8], index: 1, kind: input, shape index: {}]
  %s2 = inlined_call_operand.hbm [shape: f32[1,8], index: 2, kind: output, shape index: {}]
  %s3 = sld [smem:[#allocation0]]
  $region18: #{tpu_custom_call.1} parent=0
    _
  %s5 = ssub.s32 1, %s3
  %s6 = scalar_select 0, %s5, %s3
  $region1: #{tpu_custom_call.1} parent=0
    #allocation2 [shape = 'u8[512]{0}', space=vmem, size = 0x400, scoped, tag = 'output window, operand 0, single buffered']
    #allocation3 [shape = 's32[1]{0}', space=sflag, size = 0x4, scoped, tag = 'scoped memory for tpu_custom_call.1']
    %7 = vsyncpa [#allocation3], 0
    // Predicated region
    $region2: #{tpu_custom_call.1} parent=1 // pred_check
      _
    $region3: #{tpu_custom_call.1} parent=1 // pred_check_branch
      %9 = sbr.rel (0) target = $region5
    $region4: #{tpu_custom_call.1} parent=1 // pred_region
      _
    $region5: #{tpu_custom_call.1} parent=1 // pred_fallthru
      _
    // Predicated region
    $region6: #{tpu_custom_call.1} parent=1 // pred_check
      _
    $region7: #{tpu_custom_call.1} parent=1 // pred_check_branch
      %11 = sbr.rel (0) target = $region9
    $region8: #{tpu_custom_call.1} parent=1 // pred_region
      _
    $region9: #{tpu_custom_call.1} parent=1 // pred_fallthru
      _
    %v12 = vld [vmem:[%s0] sm:$0x1]
    %v13 = vld [vmem:[%s1] sm:$0xff]
    %v14 = vld [vmem:[%s1 + $0x8] sm:$0xff]
    %v15 = vld [vmem:[%s1 + $0x10] sm:$0xff]
    %v16 = vld [vmem:[%s1 + $0x18] sm:$0xff]
    %v17 = vld [vmem:[%s1 + $0x20] sm:$0xff]
    %v18 = vld [vmem:[%s1 + $0x28] sm:$0xff]
    %v19 = vld [vmem:[%s1 + $0x30] sm:$0xff]
    %v20 = vld [vmem:[%s1 + $0x38] sm:$0xff]
    %v21 = vld [vmem:[%s1 + $0x40] sm:$0xff]
    %v22 = vld [vmem:[%s1 + $0x48] sm:$0xff]
    %v23 = vld [vmem:[%s1 + $0x50] sm:$0xff]
    %v24 = vld [vmem:[%s1 + $0x58] sm:$0xff]
    %v25 = vld [vmem:[%s1 + $0x60] sm:$0xff]
    %v26 = vld [vmem:[%s1 + $0x68] sm:$0xff]
    %v27 = vld [vmem:[%s1 + $0x70] sm:$0xff]
    %v28 = vld [vmem:[%s1 + $0x78] sm:$0xff]
    %29 = vmatprep.subr.mxu0 0.0
    %30 = vmatpush1.msra.mxu0 %v28
    %31 = vmatprep.subr.mxu0 0.0
    %32 = vmatpush1.msra.mxu0 %v27
    %33 = vmatprep.subr.mxu0 0.0
    %34 = vmatpush1.msra.mxu0 %v26
    %35 = vmatprep.subr.mxu0 0.0
    %36 = vmatpush1.msra.mxu0 %v25
    %37 = vmatprep.subr.mxu0 0.0
    %38 = vmatpush1.msra.mxu0 %v24
    %39 = vmatprep.subr.mxu0 0.0
    %40 = vmatpush1.msra.mxu0 %v23
    %41 = vmatprep.subr.mxu0 0.0
    %42 = vmatpush1.msra.mxu0 %v22
    %43 = vmatprep.subr.mxu0 0.0
    %44 = vmatpush1.msra.mxu0 %v21
    %45 = vmatprep.subr.mxu0 0.0
    %46 = vmatpush1.msra.mxu0 %v20
    %47 = vmatprep.subr.mxu0 0.0
    %48 = vmatpush1.msra.mxu0 %v19
    %49 = vmatprep.subr.mxu0 0.0
    %50 = vmatpush1.msra.mxu0 %v18
    %51 = vmatprep.subr.mxu0 0.0
    %52 = vmatpush1.msra.mxu0 %v17
    %53 = vmatprep.subr.mxu0 0.0
    %54 = vmatpush1.msra.mxu0 %v16
    %55 = vmatprep.subr.mxu0 0.0
    %56 = vmatpush1.msra.mxu0 %v15
    %57 = vmatprep.subr.mxu0 0.0
    %58 = vmatpush1.msra.mxu0 %v14
    %59 = vmatprep.subr.mxu0 0.0
    %60 = vmatpush1.msra.mxu0 %v13
    %61 = vmatprep.subr.mxu0 0.0
    %62 = vmatpush2.msra.mxu0 0.0
    %63 = vmatprep.subr.mxu0 0.0
    %64 = vmatpush2.msra.mxu0 0.0
    %65 = vmatprep.subr.mxu0 0.0
    %66 = vmatpush2.msra.mxu0 0.0
    %67 = vmatprep.subr.mxu0 0.0
    %68 = vmatpush2.msra.mxu0 0.0
    %69 = vmatprep.subr.mxu0 0.0
    %70 = vmatpush2.msra.mxu0 0.0
    %71 = vmatprep.subr.mxu0 0.0
    %72 = vmatpush2.msra.mxu0 0.0
    %73 = vmatprep.subr.mxu0 0.0
    %74 = vmatpush2.msra.mxu0 0.0
    %75 = vmatprep.subr.mxu0 0.0
    %76 = vmatpush2.msra.mxu0 0.0
    %77 = vmatprep.subr.mxu0 0.0
    %78 = vmatpush2.msra.mxu0 0.0
    %79 = vmatprep.subr.mxu0 0.0
    %80 = vmatpush2.msra.mxu0 0.0
    %81 = vmatprep.subr.mxu0 0.0
    %82 = vmatpush2.msra.mxu0 0.0
    %83 = vmatprep.subr.mxu0 0.0
    %84 = vmatpush2.msra.mxu0 0.0
    %85 = vmatprep.subr.mxu0 0.0
    %86 = vmatpush2.msra.mxu0 0.0
    %87 = vmatprep.subr.mxu0 0.0
    %88 = vmatpush2.msra.mxu0 0.0
    %89 = vmatprep.subr.mxu0 0.0
    %90 = vmatpush2.msra.mxu0 0.0
    %91 = vmatprep.subr.mxu0 0.0
    %92 = vmatpush2.msra.mxu0 0.0
    %93 = vmatprep.mubr.f32.mxu0 0.0
    %94 = vmatmul.mubr.f32.gmra.mxu0 %v12
    %v95 = vpop.f32.mrf.mxu0
    %v96 = vadd.f32 0.0, %v95
    %v97 = vpop.f32.mrf.mxu0
    %98 = vdwg.mxu0
    %vm99 = vcmask 57344
    %100 = vst.msk [vmem:[#allocation2] sm:$0x1] %vm99, %v96
    // Predicated region
    $region10: #{tpu_custom_call.1} parent=1 // pred_check
      _
    $region11: #{tpu_custom_call.1} parent=1 // pred_check_branch
      %102 = sbr.rel (0) target = $region13
    $region12: #{tpu_custom_call.1} parent=1 // pred_region
      %s104 = ssub.s32 16, 16
      %105 = vsyncadd [#allocation3], %s104
      %s107 = sshll.u32 [#allocation2], 4
      %s108 = int_to_ptr.vmem [resolvable:$true] %s107
      %110 = dma.vmem_to_hbm [thread:$0]  %s108, 16, %s2, [#allocation3]
    $region13: #{tpu_custom_call.1} parent=1 // pred_fallthru
      _
    // Predicated region
    $region14: #{tpu_custom_call.1} parent=1 // pred_check
      _
    $region15: #{tpu_custom_call.1} parent=1 // pred_check_branch
      %112 = sbr.rel (0) target = $region17
    $region16: #{tpu_custom_call.1} parent=1 // pred_region
      %113 = dma.done [#allocation3], 16
    $region17: #{tpu_custom_call.1} parent=1 // pred_fallthru
      _
    %114 = vsyncpa [#allocation3], 1

</llo_original>
